<compile_context>
chip_gen: v5e
topology: v5e:2x2
jax: 0.10.0
libtpu: 0.0.40
codegen_flags: <defaults>
</compile_context>

<pallas_src>
import functools

import jax
import jax.numpy as jnp
from jax.experimental import pallas as pl
from jax.experimental.pallas import tpu as pltpu


# ---------------------------------------------------------------------------
# Hardware / tiling helpers
# ---------------------------------------------------------------------------
def _cdiv(a, b):
    return -(-a // b)


def _sublane_multiple(dtype):
    """Sublane tile for a dtype: 8 rows (f32), 16 (bf16), 32 (int8/fp8)."""
    return max(8, 32 // jnp.dtype(dtype).itemsize)


def _bf16_compute_ok():
    """bf16 VPU exists on v6e / v7x, not on v5e and older."""
    try:
        kind = jax.devices()[0].device_kind.lower()
    except Exception:
        return False
    return any(tag in kind for tag in ("v6", "v7", "7x"))


def _vmem_budget(itemsize):
    """Returns (vmem_limit_bytes, max I/O elements per block).

    Footprint per block element: 4 pipeline buffers (input + output, double
    buffered) in the I/O dtype plus ~3 block-sized f32 intermediates (the f32
    upcast, the centered copy and the normalized value) inside the kernel.
    """
    phys = 64 * 1024 * 1024               # conservative: v7x has the smallest VMEM
    try:
        info = pltpu.get_tpu_info()
        phys = int(getattr(info, "vmem_capacity_bytes", phys)) or phys
    except Exception:
        pass
    vmem_limit = min(phys * 3 // 4, 96 * 1024 * 1024)
    bytes_per_elem = 4 * itemsize + 3 * 4
    max_elems = vmem_limit // bytes_per_elem
    # Measured tile curves saturate ~85% of HBM roofline around 1-4 MiB of
    # I/O bytes per block; bigger blocks only remove pipelining steps.
    max_elems = min(max_elems, (4 * 1024 * 1024) // itemsize)
    return vmem_limit, int(max_elems)


def _pick_tile(total, cap, multiple):
    """Tile along one axis.

    Returns the full extent if it fits (always a legal block dim); else the
    largest `multiple`-aligned divisor of `total` that fits; else the aligned
    cap itself, in which case the caller's pl.cdiv grid plus Pallas' masked
    edge block handle the ragged tail.
    """
    total = int(total)
    cap = max(multiple, (int(cap) // multiple) * multiple)
    if total <= cap:
        return total
    best = 0
    d = 1
    while d * d <= total:
        if total % d == 0:
            for cand in (d, total // d):
                if cand <= cap and cand % multiple == 0 and cand > best:
                    best = cand
        d += 1
    return best if best else cap


# ---------------------------------------------------------------------------
# channels_first: normalize over C for every (b, h, w) position.
# x kernel view: (Bt, C, lane_tile); weight/bias: (C, 1).
# Spatial axis sits lane-dense (128 lanes), C on sublanes.
# ---------------------------------------------------------------------------
def _ln_channels_first_kernel(x_ref, w_ref, b_ref, o_ref, *, eps):
    x = x_ref[...].astype(jnp.float32)                 # (Bt, C, T)
    u = jnp.mean(x, axis=1, keepdims=True)             # (Bt, 1, T)
    xc = x - u
    s = jnp.mean(xc * xc, axis=1, keepdims=True)       # biased variance
    y = xc * jax.lax.rsqrt(s + eps)                    # (Bt, C, T), f32 stats
    w = w_ref[...][None]                               # (1, C, 1)
    b = b_ref[...][None]
    y = y.astype(w.dtype)   # bf16 affine epilogue on v6e/v7x when I/O is bf16
    o_ref[...] = (w * y + b).astype(o_ref.dtype)


def layernorm_channels_first(x, weight, bias, eps=1e-6, *, _max_block_elems=None):
    """x: (B, C, H, W) -> (B, C, H, W), normalized over C."""
    B, C, H, W = x.shape
    T = H * W
    xf = x.reshape(B, C, T)

    itemsize = jnp.dtype(x.dtype).itemsize
    sub_mult = _sublane_multiple(x.dtype)
    c_pad = -(-C // sub_mult) * sub_mult               # C pads to sublane tile in VMEM
    vmem_limit, max_elems = _vmem_budget(itemsize)
    if _max_block_elems is not None:                   # test hook
        max_elems = int(_max_block_elems)

    ep_dtype = (jnp.bfloat16
                if (x.dtype == jnp.bfloat16 and _bf16_compute_ok())
                else jnp.float32)
    w2 = weight.reshape(C, 1).astype(ep_dtype)
    b2 = bias.reshape(C, 1).astype(ep_dtype)

    # Lane (spatial) tile: contiguous in HBM, as fat as the budget allows.
    max_lane = max(128, (max_elems // c_pad) // 128 * 128)
    if B < 4 and T >= 4 * 128:
        # The batch axis can't give each v7x core >=2 pipelined steps, so make
        # the spatial axis carry >=4 grid steps instead.
        max_lane = min(max_lane, max(128, (T // 4) // 128 * 128))
    lane_tile = _pick_tile(T, max_lane, 128)
    n_t = _cdiv(T, lane_tile)

    # Fatten along batch only once the spatial axis has collapsed to 1 block,
    # keeping >=4 batch steps when B is large enough to feed both v7x cores.
    bt = 1
    if n_t == 1 and B > 1:
        per_b = c_pad * lane_tile
        max_bt = max(1, max_elems // per_b)
        if B >= 8:
            max_bt = min(max_bt, B // 4)
        bt = _pick_tile(B, max_bt, 1)
    n_b = _cdiv(B, bt)

    # Put the axis with more steps outermost so the cross-core (megacore)
    # split lands on an axis that actually has extent.
    if n_b >= n_t:
        grid = (n_b, n_t)
        xmap = lambda i, j: (i, 0, j)
    else:
        grid = (n_t, n_b)
        xmap = lambda i, j: (j, 0, i)
    wmap = lambda i, j: (0, 0)

    kernel = functools.partial(_ln_channels_first_kernel, eps=eps)
    out = pl.pallas_call(
        kernel,
        out_shape=jax.ShapeDtypeStruct((B, C, T), x.dtype),
        grid_spec=pltpu.PrefetchScalarGridSpec(
            num_scalar_prefetch=0,
            grid=grid,
            in_specs=[
                pl.BlockSpec((bt, C, lane_tile), xmap),
                pl.BlockSpec((C, 1), wmap),
                pl.BlockSpec((C, 1), wmap),
            ],
            out_specs=pl.BlockSpec((bt, C, lane_tile), xmap),
        ),
        compiler_params=pltpu.CompilerParams(
            dimension_semantics=("parallel", "parallel"),
            vmem_limit_bytes=vmem_limit),
    )(xf, w2, b2)
    return out.reshape(B, C, H, W)


# ---------------------------------------------------------------------------
# channels_last: standard layer norm over the last dim (C).
# Direct (rows, C) kernel for C >= 64; tiny C reroutes through channels_first.
# ---------------------------------------------------------------------------
def _ln_channels_last_kernel(x_ref, w_ref, b_ref, o_ref, *, eps):
    x = x_ref[...].astype(jnp.float32)                 # (R, C)
    u = jnp.mean(x, axis=-1, keepdims=True)            # (R, 1)
    xc = x - u
    s = jnp.mean(xc * xc, axis=-1, keepdims=True)      # biased variance
    y = xc * jax.lax.rsqrt(s + eps)
    w = w_ref[...]                                     # (1, C)
    b = b_ref[...]
    y = y.astype(w.dtype)
    o_ref[...] = (y * w + b).astype(o_ref.dtype)


def layernorm_channels_last(x, weight, bias, eps=1e-6, *, _max_block_elems=None):
    """x: (B, H, W, C) -> (B, H, W, C), normalized over C (F.layer_norm)."""
    B, H, W, C = x.shape
    if C < 64:
        # Tiny C: a (rows, C) layout wastes >50% of every vreg / vst lane and
        # makes the HBM DMAs strided, so route through the channels_first
        # layout (C on sublanes, spatial lane-dense).  For moderate unaligned
        # C (>= 64) the direct kernel below beats paying ~3x HBM traffic for
        # the two transposes.
        x_cf = jnp.transpose(x, (0, 3, 1, 2))          # NHWC -> NCHW
        out = layernorm_channels_first(x_cf, weight, bias, eps,
                                       _max_block_elems=_max_block_elems)
        return jnp.transpose(out, (0, 2, 3, 1))        # NCHW -> NHWC

    R = B * H * W
    xf = x.reshape(R, C)
    itemsize = jnp.dtype(x.dtype).itemsize
    sub_mult = _sublane_multiple(x.dtype)
    c_lane_pad = -(-C // 128) * 128                    # C pads to 128 lanes in VMEM
    vmem_limit, max_elems = _vmem_budget(itemsize)
    if _max_block_elems is not None:                   # test hook
        max_elems = int(_max_block_elems)

    ep_dtype = (jnp.bfloat16
                if (x.dtype == jnp.bfloat16 and _bf16_compute_ok())
                else jnp.float32)
    w2 = weight.reshape(1, C).astype(ep_dtype)
    b2 = bias.reshape(1, C).astype(ep_dtype)

    max_rows = max(sub_mult, (max_elems // c_lane_pad) // sub_mult * sub_mult)
    if R >= 4 * sub_mult:
        # >=4 grid steps so both v7x cores get >=2 pipelined steps each.
        max_rows = min(max_rows,
                       max(sub_mult, (R // 4) // sub_mult * sub_mult))
    row_tile = _pick_tile(R, max_rows, sub_mult)
    grid = (_cdiv(R, row_tile),)

    kernel = functools.partial(_ln_channels_last_kernel, eps=eps)
    out = pl.pallas_call(
        kernel,
        out_shape=jax.ShapeDtypeStruct((R, C), x.dtype),
        grid_spec=pltpu.PrefetchScalarGridSpec(
            num_scalar_prefetch=0,
            grid=grid,
            in_specs=[
                pl.BlockSpec((row_tile, C), lambda i: (i, 0)),
                pl.BlockSpec((1, C), lambda i: (0, 0)),
                pl.BlockSpec((1, C), lambda i: (0, 0)),
            ],
            out_specs=pl.BlockSpec((row_tile, C), lambda i: (i, 0)),
        ),
        compiler_params=pltpu.CompilerParams(
            dimension_semantics=("parallel",),
            vmem_limit_bytes=vmem_limit),
    )(xf, w2, b2)
    return out.reshape(B, H, W, C)


# ---------------------------------------------------------------------------
# Module-like wrapper (eps default 1e-6 matches the original nn.Module spec)
# ---------------------------------------------------------------------------
class LayerNormPallas:
    def __init__(self, normalized_shape, eps=1e-6, data_format="channels_first"):
        if data_format not in ("channels_last", "channels_first"):
            raise NotImplementedError
        self.eps = eps
        self.data_format = data_format
        self.normalized_shape = (normalized_shape,)
        # Deterministic init, matching nn.Parameter(torch.ones/zeros(C)).
        self.weight = jnp.ones((normalized_shape,), dtype=jnp.float32)
        self.bias = jnp.zeros((normalized_shape,), dtype=jnp.float32)

    def __call__(self, x):
        if self.data_format == "channels_first":
            return layernorm_channels_first(x, self.weight, self.bias, self.eps)
        return layernorm_channels_last(x, self.weight, self.bias, self.eps)


# ---------------------------------------------------------------------------
# Pure-JAX references
# ---------------------------------------------------------------------------
def _ref_channels_first(x, w, b, eps):
    u = jnp.mean(x, axis=1, keepdims=True)
    s = jnp.mean((x - u) ** 2, axis=1, keepdims=True)
    y = (x - u) / jnp.sqrt(s + eps)
    return w[None, :, None, None] * y + b[None, :, None, None]


def _ref_channels_last(x, w, b, eps):
    u = jnp.mean(x, axis=-1, keepdims=True)
    s = jnp.mean((x - u) ** 2, axis=-1, keepdims=True)
    y = (x - u) / jnp.sqrt(s + eps)
    return y * w + b


if __name__ == "__main__":
    key = jax.random.PRNGKey(0)
    k1, k2, k3, k4, k5, k6 = jax.random.split(key, 6)

    # channels_first (module default): NCHW with small C.
    B, C, H, W = 2, 4, 16, 16
    x_cf = jax.random.normal(k1, (B, C, H, W), dtype=jnp.float32)
    ln_cf = LayerNormPallas(C, eps=1e-6, data_format="channels_first")
    ln_cf.weight = ln_cf.weight * 1.5
    ln_cf.bias = ln_cf.bias + 0.25
    out_cf = jax.block_until_ready(ln_cf(x_cf))
    ref_cf = _ref_channels_first(x_cf, ln_cf.weight, ln_cf.bias, 1e-6)
    assert jnp.allclose(out_cf, ref_cf, atol=1e-5, rtol=1e-5)

    # channels_last with tiny C -> routed through the channels_first layout.
    x_cl = jax.random.normal(k2, (B, H, W, C), dtype=jnp.float32)
    ln_cl = LayerNormPallas(C, eps=1e-6, data_format="channels_last")
    ln_cl.weight = ln_cl.weight * 0.75
    ln_cl.bias = ln_cl.bias - 0.1
    out_cl = jax.block_until_ready(ln_cl(x_cl))
    ref_cl = _ref_channels_last(x_cl, ln_cl.weight, ln_cl.bias, 1e-6)
    assert jnp.allclose(out_cl, ref_cl, atol=1e-5, rtol=1e-5)

    # channels_last, lane-aligned C -> direct (rows, C) kernel, >=4 grid steps.
    Cd = 128
    x_cld = jax.random.normal(k3, (2, 8, 8, Cd), dtype=jnp.float32)
    ln_cld = LayerNormPallas(Cd, eps=1e-6, data_format="channels_last")
    out_cld = jax.block_until_ready(ln_cld(x_cld))
    ref_cld = _ref_channels_last(x_cld, ln_cld.weight, ln_cld.bias, 1e-6)
    assert jnp.allclose(out_cld, ref_cld, atol=1e-5, rtol=1e-5)

    # channels_last, moderate unaligned C: stays on the direct kernel now
    # (masked tail lanes) instead of the 3x-HBM transpose path.
    Cm = 192
    x_clm = jax.random.normal(k4, (2, 4, 4, Cm), dtype=jnp.float32)
    ln_clm = LayerNormPallas(Cm, eps=1e-6, data_format="channels_last")
    out_clm = jax.block_until_ready(ln_clm(x_clm))
    ref_clm = _ref_channels_last(x_clm, ln_clm.weight, ln_clm.bias, 1e-6)
    assert jnp.allclose(out_clm, ref_clm, atol=1e-5, rtol=1e-5)

    # channels_first with a spatial extent that has no 128-aligned divisor
    # under a (test-only) tiny block cap -> exercises the pl.cdiv grid with a
    # masked edge block instead of the old full-extent fallback.
    wo = jnp.ones((8,), dtype=jnp.float32)
    bo = jnp.zeros((8,), dtype=jnp.float32)
    x_odd = jax.random.normal(k5, (1, 8, 18, 20), dtype=jnp.float32)
    out_odd = jax.block_until_ready(
        layernorm_channels_first(x_odd, wo, bo, 1e-6, _max_block_elems=8 * 128))
    ref_odd = _ref_channels_first(x_odd, wo, bo, 1e-6)
    assert jnp.allclose(out_odd, ref_odd, atol=1e-5, rtol=1e-5)

    # bf16 I/O (halves HBM traffic); stats stay f32, affine epilogue runs in
    # bf16 on v6e/v7x only (no bf16 VPU on v5e).
    x_bf = jax.random.normal(k6, (B, C, H, W), dtype=jnp.bfloat16)
    out_bf = jax.block_until_ready(ln_cf(x_bf))
    assert out_bf.dtype == jnp.bfloat16
    ref_bf = _ref_channels_first(x_bf.astype(jnp.float32),
                                 ln_cf.weight, ln_cf.bias, 1e-6)
    assert jnp.allclose(out_bf.astype(jnp.float32), ref_bf, atol=5e-2, rtol=5e-2)

    print("KERNEL_OK")
</pallas_src>

<mosaic_0001>
module attributes {stable_mosaic.version = 11 : i64} {
  func.func @_ln_channels_first_kernel(%arg0: i32, %arg1: i32, %arg2: memref<2x4x256xf32, #tpu.memory_space<vmem>>, %arg3: memref<4x1xf32, #tpu.memory_space<vmem>>, %arg4: memref<4x1xf32, #tpu.memory_space<vmem>>, %arg5: memref<2x4x256xf32, #tpu.memory_space<vmem>>) attributes {dimension_semantics = [#tpu.dimension_semantics<parallel>, #tpu.dimension_semantics<parallel>], iteration_bounds = array<i64: 1, 1>, scalar_prefetch = 0 : i64, scratch_operands = 0 : i64, tpu.core_type = #tpu.core_type<tc>, window_params = [{transform_indices = @transform_0, window_bounds = array<i64: 2, 4, 256>}, {pipeline_mode = #tpu.pipeline_mode<synchronous>, transform_indices = @transform_1, window_bounds = array<i64: 4, 1>}, {pipeline_mode = #tpu.pipeline_mode<synchronous>, transform_indices = @transform_2, window_bounds = array<i64: 4, 1>}, {transform_indices = @transform_3, window_bounds = array<i64: 2, 4, 256>}]} {
    %c0 = arith.constant 0 : index
    %c0_0 = arith.constant 0 : index
    %c0_1 = arith.constant 0 : index
    %0 = vector.load %arg2[%c0, %c0_0, %c0_1] : memref<2x4x256xf32, #tpu.memory_space<vmem>>, vector<2x4x256xf32>
    %cst = arith.constant dense<0.000000e+00> : vector<2x256xf32>
    %1 = vector.multi_reduction <add>, %0, %cst [1] : vector<2x4x256xf32> to vector<2x256xf32>
    %2 = vector.shape_cast %1 : vector<2x256xf32> to vector<2x1x256xf32>
    %cst_2 = arith.constant 4.000000e+00 : f32
    %3 = vector.broadcast %cst_2 : f32 to vector<2x1x256xf32>
    %4 = arith.divf %2, %3 : vector<2x1x256xf32>
    %5 = vector.broadcast %4 : vector<2x1x256xf32> to vector<2x4x256xf32>
    %6 = arith.subf %0, %5 : vector<2x4x256xf32>
    %7 = arith.mulf %6, %6 : vector<2x4x256xf32>
    %cst_3 = arith.constant dense<0.000000e+00> : vector<2x256xf32>
    %8 = vector.multi_reduction <add>, %7, %cst_3 [1] : vector<2x4x256xf32> to vector<2x256xf32>
    %9 = vector.shape_cast %8 : vector<2x256xf32> to vector<2x1x256xf32>
    %cst_4 = arith.constant 4.000000e+00 : f32
    %10 = vector.broadcast %cst_4 : f32 to vector<2x1x256xf32>
    %11 = arith.divf %9, %10 : vector<2x1x256xf32>
    %cst_5 = arith.constant 9.99999997E-7 : f32
    %12 = vector.broadcast %cst_5 : f32 to vector<2x1x256xf32>
    %13 = arith.addf %11, %12 : vector<2x1x256xf32>
    %14 = math.rsqrt %13 : vector<2x1x256xf32>
    %15 = vector.broadcast %14 : vector<2x1x256xf32> to vector<2x4x256xf32>
    %16 = arith.mulf %6, %15 : vector<2x4x256xf32>
    %c0_6 = arith.constant 0 : index
    %c0_7 = arith.constant 0 : index
    %17 = vector.load %arg3[%c0_6, %c0_7] : memref<4x1xf32, #tpu.memory_space<vmem>>, vector<4x1xf32>
    %18 = vector.shape_cast %17 : vector<4x1xf32> to vector<1x4x1xf32>
    %c0_8 = arith.constant 0 : index
    %c0_9 = arith.constant 0 : index
    %19 = vector.load %arg4[%c0_8, %c0_9] : memref<4x1xf32, #tpu.memory_space<vmem>>, vector<4x1xf32>
    %20 = vector.shape_cast %19 : vector<4x1xf32> to vector<1x4x1xf32>
    %21 = vector.broadcast %18 : vector<1x4x1xf32> to vector<2x4x256xf32>
    %22 = arith.mulf %21, %16 : vector<2x4x256xf32>
    %23 = vector.broadcast %20 : vector<1x4x1xf32> to vector<2x4x256xf32>
    %24 = arith.addf %22, %23 : vector<2x4x256xf32>
    %c0_10 = arith.constant 0 : index
    %c0_11 = arith.constant 0 : index
    %c0_12 = arith.constant 0 : index
    %25 = vector.load %arg5[%c0_10, %c0_11, %c0_12] : memref<2x4x256xf32, #tpu.memory_space<vmem>>, vector<2x4x256xf32>
    tpu.vector_store %arg5[%c0_10, %c0_11, %c0_12], %24 {strides = array<i32>} : memref<2x4x256xf32, #tpu.memory_space<vmem>>, vector<2x4x256xf32>,
    return
  }
  func.func @transform_0(%arg0: i32, %arg1: i32) -> (i32, i32, i32) {
    %c0_i32 = arith.constant 0 : i32
    %c0_i32_0 = arith.constant 0 : i32
    return %arg0, %c0_i32, %arg1 : i32, i32, i32
  }
  func.func @transform_1(%arg0: i32, %arg1: i32) -> (i32, i32) {
    %c0_i32 = arith.constant 0 : i32
    %c0_i32_0 = arith.constant 0 : i32
    %c0_i32_1 = arith.constant 0 : i32
    return %c0_i32, %c0_i32_0 : i32, i32
  }
  func.func @transform_2(%arg0: i32, %arg1: i32) -> (i32, i32) {
    %c0_i32 = arith.constant 0 : i32
    %c0_i32_0 = arith.constant 0 : i32
    %c0_i32_1 = arith.constant 0 : i32
    return %c0_i32, %c0_i32_0 : i32, i32
  }
  func.func @transform_3(%arg0: i32, %arg1: i32) -> (i32, i32, i32) {
    %c0_i32 = arith.constant 0 : i32
    %c0_i32_0 = arith.constant 0 : i32
    return %arg0, %c0_i32, %arg1 : i32, i32, i32
  }
}

</mosaic_0001>

<llo_original>
// kernel: tpu_custom_call.1
$region0: #{tpu_custom_call.1}
  #allocation0 [shape = 'u32[]', space=smem, size = 0x4, offset = 0x4, fixed_abs, tag = 'smem constant byte address 0x4 - core index']
  #allocation1 [shape = 'u32[72,128]{1,0:T(1,128)}', space=vmem, size = 0x9000, scoped, tag = 'internal scratch']
  %s0 = inlined_call_operand.hbm [shape: f32[2,4,256], index: 0, kind: input, shape index: {}]
  %s1 = inlined_call_operand.vmem [shape: f32[4,1], index: 1, kind: input, shape index: {}]
  %s2 = inlined_call_operand.vmem [shape: f32[4,1], index: 2, kind: input, shape index: {}]
  %s3 = inlined_call_operand.hbm [shape: f32[2,4,256], index: 3, kind: output, shape index: {}]
  %s4 = sld [smem:[#allocation0]]
  $region26: #{tpu_custom_call.1} parent=0
    _
  %s6 = ssub.s32 1, %s4
  %s7 = scalar_select 0, %s6, %s4
  $region1: #{tpu_custom_call.1} parent=0
    #allocation2 [shape = 'u8[8192]{0}', space=vmem, size = 0x2000, scoped, tag = 'input window, operand 0, single buffered']
    #allocation3 [shape = 's32[1]{0}', space=sflag, size = 0x4, scoped, tag = 'scoped memory for tpu_custom_call.1']
    #allocation4 [shape = 's32[1]{0}', space=sflag, size = 0x4, scoped, tag = 'scoped memory for tpu_custom_call.1']
    #allocation5 [shape = 'u8[8192]{0}', space=vmem, size = 0x2000, scoped, tag = 'output window, operand 0, single buffered']
    %8 = vsyncpa [#allocation3], 0
    %9 = vsyncpa [#allocation4], 0
    // Predicated region
    $region2: #{tpu_custom_call.1} parent=1 // pred_check
      _
    $region3: #{tpu_custom_call.1} parent=1 // pred_check_branch
      %11 = sbr.rel (0) target = $region5
    $region4: #{tpu_custom_call.1} parent=1 // pred_region
      %13 = vsyncadd [#allocation3], 0
      %s14 = sshll.u32 %s0, 4
      %s15 = int_to_ptr.hbm [resolvable:$true] %s14
      %s16 = sshll.u32 [#allocation2], 4
      %s17 = int_to_ptr.vmem [resolvable:$true] %s16
      %22 = dma.hbm_to_vmem [thread:$0]  %s15, 256, %s17, [#allocation3], 128, 128, 8
    $region5: #{tpu_custom_call.1} parent=1 // pred_fallthru
      _
    // Predicated region
    $region6: #{tpu_custom_call.1} parent=1 // pred_check
      _
    $region7: #{tpu_custom_call.1} parent=1 // pred_check_branch
      %24 = sbr.rel (0) target = $region9
    $region8: #{tpu_custom_call.1} parent=1 // pred_region
      _
    $region9: #{tpu_custom_call.1} parent=1 // pred_fallthru
      _
    // Predicated region
    $region10: #{tpu_custom_call.1} parent=1 // pred_check
      _
    $region11: #{tpu_custom_call.1} parent=1 // pred_check_branch
      %26 = sbr.rel (0) target = $region13
    $region12: #{tpu_custom_call.1} parent=1 // pred_region
      _
    $region13: #{tpu_custom_call.1} parent=1 // pred_fallthru
      _
    // Predicated region
    $region14: #{tpu_custom_call.1} parent=1 // pred_check
      _
    $region15: #{tpu_custom_call.1} parent=1 // pred_check_branch
      %28 = sbr.rel (0) target = $region17
    $region16: #{tpu_custom_call.1} parent=1 // pred_region
      %30 = dma.done [#allocation3], 256
    $region17: #{tpu_custom_call.1} parent=1 // pred_fallthru
      _
    %v31 = vld [vmem:[#allocation2] sm:$0xff]
    %v32 = vld [vmem:[#allocation2 + $0x8] sm:$0xff]
    %35 = vst [vmem:[#allocation1] ss:$2 sm:$0xff] %v31
    %v36 = vld.sshfl [vmem:[#allocation1] sm:$0xff pattern:$0x75316420]
    %v37 = vld.sshfl [vmem:[#allocation1 + $0x8] sm:$0xff pattern:$0x75316420]
    %s38 = scalar_lea.vmem [#allocation1], 16
    %39 = vst [vmem:[%s38] ss:$2 sm:$0xff] %v32
    %v40 = vld.sshfl [vmem:[#allocation1 + $0x10] sm:$0xff pattern:$0x75316420]
    %v41 = vld.sshfl [vmem:[#allocation1 + $0x18] sm:$0xff pattern:$0x75316420]
    %vm46 = vcmask 1043456
    %v47 = vsel %vm46, %v36, 0.0
    %v48 = vrot.slane %v47, 4
    %v49 = vadd.f32 %v47, %v48
    %v50 = vrot.slane %v49, 2
    %v51 = vadd.f32 %v49, %v50
    %v52 = vrot.slane %v51, 1
    %v53 = vadd.f32 %v51, %v52
    %v54 = vsel %vm46, %v37, 0.0
    %v55 = vrot.slane %v54, 4
    %v56 = vadd.f32 %v54, %v55
    %v57 = vrot.slane %v56, 2
    %v58 = vadd.f32 %v56, %v57
    %v59 = vrot.slane %v58, 1
    %v60 = vadd.f32 %v58, %v59
    %v61 = vsel %vm46, %v40, 0.0
    %v62 = vrot.slane %v61, 4
    %v63 = vadd.f32 %v61, %v62
    %v64 = vrot.slane %v63, 2
    %v65 = vadd.f32 %v63, %v64
    %v66 = vrot.slane %v65, 1
    %v67 = vadd.f32 %v65, %v66
    %v68 = vsel %vm46, %v41, 0.0
    %v69 = vrot.slane %v68, 4
    %v70 = vadd.f32 %v68, %v69
    %v71 = vrot.slane %v70, 2
    %v72 = vadd.f32 %v70, %v71
    %v73 = vrot.slane %v72, 1
    %v74 = vadd.f32 %v72, %v73
    %v75 = vrcp.pop 4.0
    %v76 = vmul.f32 4.0, %v75
    %v77 = vsub.f32 1.0, %v76
    %v78 = vmul.f32 %v75, %v77
    %v79 = vadd.f32 %v75, %v78
    %vm80 = vweird.f32 %v75
    %v81 = vsel %vm80, %v75, %v79
    %v82 = vmul.f32 %v53, %v81
    %v83 = vmul.f32 %v60, %v81
    %v84 = vmul.f32 %v67, %v81
    %v85 = vmul.f32 %v74, %v81
    %v90 = vrot.slane %v83, 4
    %v91 = vrot.slane %v85, 4
    %v92 = vsel %vm46, %v82, %v90
    %v93 = vsel %vm46, %v84, %v91
    %v96 = vsub.f32 %v31, %v92
    %v97 = vsub.f32 %v32, %v93
    %v98 = vmul.f32 %v96, %v96
    %v99 = vmul.f32 %v97, %v97
    %102 = vst [vmem:[#allocation1] ss:$2 sm:$0xff] %v98
    %v103 = vld.sshfl [vmem:[#allocation1] sm:$0xff pattern:$0x75316420]
    %v104 = vld.sshfl [vmem:[#allocation1 + $0x8] sm:$0xff pattern:$0x75316420]
    %s105 = scalar_lea.vmem [#allocation1], 16
    %106 = vst [vmem:[%s105] ss:$2 sm:$0xff] %v99
    %v107 = vld.sshfl [vmem:[#allocation1 + $0x10] sm:$0xff pattern:$0x75316420]
    %v108 = vld.sshfl [vmem:[#allocation1 + $0x18] sm:$0xff pattern:$0x75316420]
    %v113 = vsel %vm46, %v103, 0.0
    %v114 = vrot.slane %v113, 4
    %v115 = vadd.f32 %v113, %v114
    %v116 = vrot.slane %v115, 2
    %v117 = vadd.f32 %v115, %v116
    %v118 = vrot.slane %v117, 1
    %v119 = vadd.f32 %v117, %v118
    %v120 = vsel %vm46, %v104, 0.0
    %v121 = vrot.slane %v120, 4
    %v122 = vadd.f32 %v120, %v121
    %v123 = vrot.slane %v122, 2
    %v124 = vadd.f32 %v122, %v123
    %v125 = vrot.slane %v124, 1
    %v126 = vadd.f32 %v124, %v125
    %v127 = vsel %vm46, %v107, 0.0
    %v128 = vrot.slane %v127, 4
    %v129 = vadd.f32 %v127, %v128
    %v130 = vrot.slane %v129, 2
    %v131 = vadd.f32 %v129, %v130
    %v132 = vrot.slane %v131, 1
    %v133 = vadd.f32 %v131, %v132
    %v134 = vsel %vm46, %v108, 0.0
    %v135 = vrot.slane %v134, 4
    %v136 = vadd.f32 %v134, %v135
    %v137 = vrot.slane %v136, 2
    %v138 = vadd.f32 %v136, %v137
    %v139 = vrot.slane %v138, 1
    %v140 = vadd.f32 %v138, %v139
    %v141 = vmul.f32 %v119, %v81
    %v142 = vmul.f32 %v126, %v81
    %v143 = vmul.f32 %v133, %v81
    %v144 = vmul.f32 %v140, %v81
    %v145 = vadd.f32 %v141, 1e-06
    %v146 = vadd.f32 %v142, 1e-06
    %v147 = vadd.f32 %v143, 1e-06
    %v148 = vadd.f32 %v144, 1e-06
    %v149 = vrsqrt.pop %v145
    %v150 = vmul.f32 %v149, %v145
    %v151 = vmul.f32 %v150, %v149
    %v152 = vmul.f32 0.5, %v151
    %v153 = vsub.f32 1.5, %v152
    %v154 = vmul.f32 %v149, %v153
    %vm155 = vweird.f32 %v145
    %vm156 = vweird.f32 %v149
    %vm157 = vmor %vm155, %vm156
    %v158 = vsel %vm157, %v149, %v154
    %v159 = vrsqrt.pop %v146
    %v160 = vmul.f32 %v159, %v146
    %v161 = vmul.f32 %v160, %v159
    %v162 = vmul.f32 0.5, %v161
    %v163 = vsub.f32 1.5, %v162
    %v164 = vmul.f32 %v159, %v163
    %vm165 = vweird.f32 %v146
    %vm166 = vweird.f32 %v159
    %vm167 = vmor %vm165, %vm166
    %v168 = vsel %vm167, %v159, %v164
    %v169 = vrsqrt.pop %v147
    %v170 = vmul.f32 %v169, %v147
    %v171 = vmul.f32 %v170, %v169
    %v172 = vmul.f32 0.5, %v171
    %v173 = vsub.f32 1.5, %v172
    %v174 = vmul.f32 %v169, %v173
    %vm175 = vweird.f32 %v147
    %vm176 = vweird.f32 %v169
    %vm177 = vmor %vm175, %vm176
    %v178 = vsel %vm177, %v169, %v174
    %v179 = vrsqrt.pop %v148
    %v180 = vmul.f32 %v179, %v148
    %v181 = vmul.f32 %v180, %v179
    %v182 = vmul.f32 0.5, %v181
    %v183 = vsub.f32 1.5, %v182
    %v184 = vmul.f32 %v179, %v183
    %vm185 = vweird.f32 %v148
    %vm186 = vweird.f32 %v179
    %vm187 = vmor %vm185, %vm186
    %v188 = vsel %vm187, %v179, %v184
    %v193 = vrot.slane %v168, 4
    %v194 = vrot.slane %v188, 4
    %v195 = vsel %vm46, %v158, %v193
    %v196 = vsel %vm46, %v178, %v194
    %v199 = vmul.f32 %v96, %v195
    %v200 = vmul.f32 %v97, %v196
    %v201 = vld [vmem:[%s1] sm:$0xf]
    %v202 = vld [vmem:[%s2] sm:$0xf]
    %204 = vset.pattern.permute.xlu0 0
    %205 = vperm.xlu0 %204, %v201
    %v206 = vpop.permute.xlu0 %205
    %210 = vst [vmem:[#allocation1] ss:$2 sm:$0xff] %v199
    %v211 = vld.sshfl [vmem:[#allocation1] sm:$0xff pattern:$0x75316420]
    %v212 = vld.sshfl [vmem:[#allocation1 + $0x8] sm:$0xff pattern:$0x75316420]
    %s213 = scalar_lea.vmem [#allocation1], 16
    %214 = vst [vmem:[%s213] ss:$2 sm:$0xff] %v200
    %v215 = vld.sshfl [vmem:[#allocation1 + $0x10] sm:$0xff pattern:$0x75316420]
    %v216 = vld.sshfl [vmem:[#allocation1 + $0x18] sm:$0xff pattern:$0x75316420]
    %v221 = vmul.f32 %v206, %v211
    %v222 = vmul.f32 %v206, %v212
    %v223 = vmul.f32 %v206, %v215
    %v224 = vmul.f32 %v206, %v216
    %226 = vset.pattern.permute.xlu0 0
    %227 = vperm.xlu0 %226, %v202
    %v228 = vpop.permute.xlu0 %227
    %v230 = vadd.f32 %v221, %v228
    %v231 = vadd.f32 %v222, %v228
    %v232 = vadd.f32 %v223, %v228
    %v233 = vadd.f32 %v224, %v228
    %v238 = vrot.slane %v231, 4
    %v239 = vrot.slane %v233, 4
    %v240 = vsel %vm46, %v230, %v238
    %v241 = vsel %vm46, %v232, %v239
    %244 = vst [vmem:[#allocation5] sm:$0xff] %v240
    %245 = vst [vmem:[#allocation5 + $0x8] sm:$0xff] %v241
    // Predicated region
    $region18: #{tpu_custom_call.1} parent=1 // pred_check
      _
    $region19: #{tpu_custom_call.1} parent=1 // pred_check_branch
      %247 = sbr.rel (0) target = $region21
    $region20: #{tpu_custom_call.1} parent=1 // pred_region
      %249 = vsyncadd [#allocation4], 0
      %s250 = sshll.u32 [#allocation5], 4
      %s251 = int_to_ptr.vmem [resolvable:$true] %s250
      %s252 = sshll.u32 %s3, 4
      %s253 = int_to_ptr.hbm [resolvable:$true] %s252
      %258 = dma.vmem_to_hbm [thread:$0]  %s251, 256, %s253, [#allocation4], 128, 128, 8
    $region21: #{tpu_custom_call.1} parent=1 // pred_fallthru
      _
    // Predicated region
    $region22: #{tpu_custom_call.1} parent=1 // pred_check
      _
    $region23: #{tpu_custom_call.1} parent=1 // pred_check_branch
      %260 = sbr.rel (0) target = $region25
    $region24: #{tpu_custom_call.1} parent=1 // pred_region
      %262 = dma.done [#allocation4], 256
    $region25: #{tpu_custom_call.1} parent=1 // pred_fallthru
      _
    %263 = vsyncpa [#allocation3], 1
    %264 = vsyncpa [#allocation4], 1

</llo_original>
